<compile_context>
chip_gen: v7x
topology: tpu7x:2x2x1
jax: 0.10.0
libtpu: 0.0.40
codegen_flags: <defaults>
</compile_context>

<pallas_src>
import jax
import jax.numpy as jnp
from jax.experimental import pallas as pl
from jax.experimental.pallas import tpu as pltpu


# ----------------------------------------------------------------------------
# Kernel
# ----------------------------------------------------------------------------
def _stop_control_kernel(xh_ref, c_ref, w_ref, b_ref, wout_ref, bout_ref,
                         stop_ref, h_out_ref, c_out_ref):
    """Fused LSTMCell + Linear + sigmoid.

    xh_ref  : (B, I+H)   concat([x, h_prev], axis=-1)
    c_ref   : (B, H)     previous cell state
    w_ref   : (I+H, 4H)  stacked [W_ih^T ; W_hh^T]
    b_ref   : (1, 4H)    b_ih + b_hh
    wout_ref: (1, H)     output-layer weight (row)
    bout_ref: (1, 1)     output-layer bias
    stop_ref: (B, 1)     sigmoid(logit)
    h_out   : (B, H)     new hidden
    c_out   : (B, H)     new cell
    """
    H = c_ref.shape[-1]

    xh = xh_ref[...].astype(jnp.float32)
    c = c_ref[...].astype(jnp.float32)

    # Single MXU push for all four gates.
    gates = jnp.dot(xh, w_ref[...].astype(jnp.float32),
                    preferred_element_type=jnp.float32)
    gates = gates + b_ref[...].astype(jnp.float32)

    # Full-row transcendentals (one sigmoid burst + one tanh burst on the EUP),
    # then static lane slices to pick each gate.  PyTorch gate order: i, f, g, o.
    sig = jax.nn.sigmoid(gates)
    tan = jnp.tanh(gates)

    i_g = sig[:, 0 * H:1 * H]
    f_g = sig[:, 1 * H:2 * H]
    g_g = tan[:, 2 * H:3 * H]
    o_g = sig[:, 3 * H:4 * H]

    c_new = f_g * c + i_g * g_g
    h_new = o_g * jnp.tanh(c_new)

    # N=1 output head: VPU multiply + XLU lane reduction (no second MXU trip).
    logit = jnp.sum(h_new * wout_ref[...].astype(jnp.float32),
                    axis=-1, keepdims=True)
    logit = logit + bout_ref[...].astype(jnp.float32)

    stop_ref[...] = jax.nn.sigmoid(logit).astype(stop_ref.dtype)
    h_out_ref[...] = h_new.astype(h_out_ref.dtype)
    c_out_ref[...] = c_new.astype(c_out_ref.dtype)


# ----------------------------------------------------------------------------
# Parameters
# ----------------------------------------------------------------------------
def init_stop_control_params(key, input_size, hidden_size, dtype=jnp.float32):
    """Deterministic synthetic init; shapes match nn.LSTMCell / nn.Linear."""
    ks = jax.random.split(key, 7)
    bound = 1.0 / jnp.sqrt(jnp.asarray(hidden_size, dtype))

    def u(k, shape):
        return jax.random.uniform(k, shape, dtype, minval=-bound, maxval=bound)

    return {
        "weight_ih": u(ks[0], (4 * hidden_size, input_size)),   # LSTMCell.weight_ih
        "weight_hh": u(ks[1], (4 * hidden_size, hidden_size)),  # LSTMCell.weight_hh
        "bias_ih":   u(ks[2], (4 * hidden_size,)),
        "bias_hh":   u(ks[3], (4 * hidden_size,)),
        "w_out":     u(ks[4], (1, hidden_size)),                # Linear(hidden, 1).weight
        "b_out":     jnp.zeros((1,), dtype),                    # bias.data.fill_(0.0)
        "h_0":       jax.random.normal(ks[5], (hidden_size,), dtype),
        "c_0":       jax.random.normal(ks[6], (hidden_size,), dtype),
    }


def prepare_stop_control_params(params):
    """One-time weight folding: do NOT repeat this per forward call."""
    return {
        # Stacked, pre-transposed gate weight -> a single (I+H, 4H) matmul operand.
        "w_gates": jnp.concatenate(
            [params["weight_ih"].T, params["weight_hh"].T], axis=0),
        "b_gates": (params["bias_ih"] + params["bias_hh"])[None, :],   # (1, 4H)
        "w_out":   params["w_out"],                                    # (1, H) row
        "b_out":   params["b_out"][None, :],                           # (1, 1)
        "h_0":     params["h_0"],
        "c_0":     params["c_0"],
    }


# ----------------------------------------------------------------------------
# Forward (jitted)
# ----------------------------------------------------------------------------
@jax.jit
def stop_control_forward(prepped, inputs, hx=None):
    """JAX wrapper matching StopControl.forward(inputs, hx)."""
    B = inputs.shape[0]
    H = prepped["h_0"].shape[-1]

    if hx is None:
        h_prev = jnp.broadcast_to(prepped["h_0"][None, :], (B, H))
        c_prev = jnp.broadcast_to(prepped["c_0"][None, :], (B, H))
    else:
        h_prev, c_prev = hx

    state_dtype = h_prev.dtype

    # Tiny fused concat so the kernel needs only one MXU matmul for the gates.
    xh = jnp.concatenate([inputs.astype(state_dtype), h_prev], axis=-1)  # (B, I+H)

    vmem = pl.BlockSpec(memory_space=pltpu.MemorySpace.VMEM)

    stop, h_new, c_new = pl.pallas_call(
        _stop_control_kernel,
        out_shape=(
            jax.ShapeDtypeStruct((B, 1), state_dtype),
            jax.ShapeDtypeStruct((B, H), state_dtype),
            jax.ShapeDtypeStruct((B, H), state_dtype),
        ),
        in_specs=[vmem] * 6,
        out_specs=(vmem, vmem, vmem),
    )(xh, c_prev, prepped["w_gates"], prepped["b_gates"],
      prepped["w_out"], prepped["b_out"])

    # .squeeze() on (B, 1): B=1 -> scalar, matching torch.Tensor.squeeze().
    return jnp.squeeze(stop), (h_new, c_new)


# ----------------------------------------------------------------------------
# Pure-JAX reference (same math as the PyTorch module)
# ----------------------------------------------------------------------------
def _reference_forward(params, inputs, hx=None):
    if hx is None:
        hx = (params["h_0"][None, :], params["c_0"][None, :])
    h, c = hx
    H = h.shape[-1]
    gates = (inputs @ params["weight_ih"].T + params["bias_ih"]
             + h @ params["weight_hh"].T + params["bias_hh"])
    i_g = jax.nn.sigmoid(gates[:, 0 * H:1 * H])
    f_g = jax.nn.sigmoid(gates[:, 1 * H:2 * H])
    g_g = jnp.tanh(gates[:, 2 * H:3 * H])
    o_g = jax.nn.sigmoid(gates[:, 3 * H:4 * H])
    c_new = f_g * c + i_g * g_g
    h_new = o_g * jnp.tanh(c_new)
    stop = jax.nn.sigmoid(h_new @ params["w_out"].T + params["b_out"])
    return jnp.squeeze(stop), (h_new, c_new)


if __name__ == "__main__":
    input_size = 8
    hidden_size = 32
    batch = 1   # hx=None path uses h_0/c_0 with a singleton batch, as in PyTorch

    key = jax.random.PRNGKey(0)
    pkey, xkey1, xkey2 = jax.random.split(key, 3)
    params = init_stop_control_params(pkey, input_size, hidden_size)
    prepped = prepare_stop_control_params(params)   # one-time weight folding

    x1 = jax.random.normal(xkey1, (batch, input_size), jnp.float32)
    x2 = jax.random.normal(xkey2, (batch, input_size), jnp.float32)

    # Step 1: hx=None path.
    stop1, (h1, c1) = stop_control_forward(prepped, x1, hx=None)
    # Step 2: carry the state (the recurrent use inside the AS-MAML loop).
    stop2, (h2, c2) = stop_control_forward(prepped, x2, (h1, c1))
    jax.block_until_ready((stop1, h1, c1, stop2, h2, c2))

    # Sanity checks against the pure-JAX reference.
    stop1_r, (h1_r, c1_r) = _reference_forward(params, x1, hx=None)
    stop2_r, (h2_r, c2_r) = _reference_forward(params, x2, (h1_r, c1_r))

    assert jnp.allclose(stop1, stop1_r, atol=1e-5), "stop (step 1) mismatch"
    assert jnp.allclose(h1, h1_r, atol=1e-5), "h (step 1) mismatch"
    assert jnp.allclose(c1, c1_r, atol=1e-5), "c (step 1) mismatch"
    assert jnp.allclose(stop2, stop2_r, atol=1e-5), "stop (step 2) mismatch"
    assert jnp.allclose(h2, h2_r, atol=1e-5), "h (step 2) mismatch"
    assert jnp.allclose(c2, c2_r, atol=1e-5), "c (step 2) mismatch"

    print("KERNEL_OK")
</pallas_src>

<mosaic_0001>
module attributes {stable_mosaic.version = 11 : i64} {
  func.func @_stop_control_kernel(%arg0: memref<1x40xf32, #tpu.memory_space<vmem>>, %arg1: memref<1x32xf32, #tpu.memory_space<vmem>>, %arg2: memref<40x128xf32, #tpu.memory_space<vmem>>, %arg3: memref<1x128xf32, #tpu.memory_space<vmem>>, %arg4: memref<1x32xf32, #tpu.memory_space<vmem>>, %arg5: memref<1x1xf32, #tpu.memory_space<vmem>>, %arg6: memref<1x1xf32, #tpu.memory_space<vmem>>, %arg7: memref<1x32xf32, #tpu.memory_space<vmem>>, %arg8: memref<1x32xf32, #tpu.memory_space<vmem>>) attributes {dimension_semantics = [], scalar_prefetch = 0 : i64, scratch_operands = 0 : i64, tpu.core_type = #tpu.core_type<tc>} {
    %c0 = arith.constant 0 : index
    %c0_0 = arith.constant 0 : index
    %0 = vector.load %arg0[%c0, %c0_0] : memref<1x40xf32, #tpu.memory_space<vmem>>, vector<1x40xf32>
    %c0_1 = arith.constant 0 : index
    %c0_2 = arith.constant 0 : index
    %1 = vector.load %arg1[%c0_1, %c0_2] : memref<1x32xf32, #tpu.memory_space<vmem>>, vector<1x32xf32>
    %c0_3 = arith.constant 0 : index
    %c0_4 = arith.constant 0 : index
    %2 = vector.load %arg2[%c0_3, %c0_4] : memref<40x128xf32, #tpu.memory_space<vmem>>, vector<40x128xf32>
    %cst = arith.constant dense<0.000000e+00> : vector<1x128xf32>
    %3 = tpu.matmul %0, %2, %cst {dimension_numbers = #tpu.dot_dimension_numbers<[1], [0], [0], [1], [0, 0, 1, 1], [], []>} : vector<1x40xf32>, vector<40x128xf32>, vector<1x128xf32> -> vector<1x128xf32>
    %c0_5 = arith.constant 0 : index
    %c0_6 = arith.constant 0 : index
    %4 = vector.load %arg3[%c0_5, %c0_6] : memref<1x128xf32, #tpu.memory_space<vmem>>, vector<1x128xf32>
    %5 = arith.addf %3, %4 : vector<1x128xf32>
    %6 = arith.negf %5 : vector<1x128xf32>
    %7 = math.exp %6 : vector<1x128xf32>
    %cst_7 = arith.constant 1.000000e+00 : f32
    %8 = vector.broadcast %cst_7 : f32 to vector<1x128xf32>
    %9 = arith.addf %8, %7 : vector<1x128xf32>
    %10 = arith.divf %8, %9 : vector<1x128xf32>
    %11 = math.tanh %5 : vector<1x128xf32>
    %12 = vector.extract_strided_slice %10 {offsets = [0, 0], sizes = [1, 32], strides = [1, 1]} : vector<1x128xf32> to vector<1x32xf32>
    %13 = vector.extract_strided_slice %10 {offsets = [0, 32], sizes = [1, 32], strides = [1, 1]} : vector<1x128xf32> to vector<1x32xf32>
    %14 = vector.extract_strided_slice %11 {offsets = [0, 64], sizes = [1, 32], strides = [1, 1]} : vector<1x128xf32> to vector<1x32xf32>
    %15 = vector.extract_strided_slice %10 {offsets = [0, 96], sizes = [1, 32], strides = [1, 1]} : vector<1x128xf32> to vector<1x32xf32>
    %16 = arith.mulf %13, %1 : vector<1x32xf32>
    %17 = arith.mulf %12, %14 : vector<1x32xf32>
    %18 = arith.addf %16, %17 : vector<1x32xf32>
    %19 = math.tanh %18 : vector<1x32xf32>
    %20 = arith.mulf %15, %19 : vector<1x32xf32>
    %c0_8 = arith.constant 0 : index
    %c0_9 = arith.constant 0 : index
    %21 = vector.load %arg4[%c0_8, %c0_9] : memref<1x32xf32, #tpu.memory_space<vmem>>, vector<1x32xf32>
    %22 = arith.mulf %20, %21 : vector<1x32xf32>
    %cst_10 = arith.constant dense<0.000000e+00> : vector<1xf32>
    %23 = vector.multi_reduction <add>, %22, %cst_10 [1] : vector<1x32xf32> to vector<1xf32>
    %24 = vector.shape_cast %23 : vector<1xf32> to vector<1x1xf32>
    %c0_11 = arith.constant 0 : index
    %c0_12 = arith.constant 0 : index
    %25 = vector.load %arg5[%c0_11, %c0_12] : memref<1x1xf32, #tpu.memory_space<vmem>>, vector<1x1xf32>
    %26 = arith.addf %24, %25 : vector<1x1xf32>
    %27 = arith.negf %26 : vector<1x1xf32>
    %28 = math.exp %27 : vector<1x1xf32>
    %cst_13 = arith.constant 1.000000e+00 : f32
    %29 = vector.broadcast %cst_13 : f32 to vector<1x1xf32>
    %30 = arith.addf %29, %28 : vector<1x1xf32>
    %31 = arith.divf %29, %30 : vector<1x1xf32>
    %c0_14 = arith.constant 0 : index
    %c0_15 = arith.constant 0 : index
    %32 = vector.load %arg6[%c0_14, %c0_15] : memref<1x1xf32, #tpu.memory_space<vmem>>, vector<1x1xf32>
    tpu.vector_store %arg6[%c0_14, %c0_15], %31 {strides = array<i32>} : memref<1x1xf32, #tpu.memory_space<vmem>>, vector<1x1xf32>,
    %c0_16 = arith.constant 0 : index
    %c0_17 = arith.constant 0 : index
    %33 = vector.load %arg7[%c0_16, %c0_17] : memref<1x32xf32, #tpu.memory_space<vmem>>, vector<1x32xf32>
    tpu.vector_store %arg7[%c0_16, %c0_17], %20 {strides = array<i32>} : memref<1x32xf32, #tpu.memory_space<vmem>>, vector<1x32xf32>,
    %c0_18 = arith.constant 0 : index
    %c0_19 = arith.constant 0 : index
    %34 = vector.load %arg8[%c0_18, %c0_19] : memref<1x32xf32, #tpu.memory_space<vmem>>, vector<1x32xf32>
    tpu.vector_store %arg8[%c0_18, %c0_19], %18 {strides = array<i32>} : memref<1x32xf32, #tpu.memory_space<vmem>>, vector<1x32xf32>,
    return
  }
}

</mosaic_0001>

<llo_original>
// kernel: stop_control_forward.1
$region0: #{stop_control_forward.1}
  #allocation0 [shape = 'u32[]', space=smem, size = 0x4, offset = 0x4, fixed_abs, tag = 'smem constant byte address 0x4 - core index']
  #allocation1 [shape = 'u32[144,128]{1,0:T(1,128)}', space=vmem, size = 0x12000, scoped, tag = 'internal scratch']
  #allocation2 [shape = 'f32[1,1]{1,0:T(1,128)S(1)}', space=vmem, size = 0x200, scoped, tag = 'scoped memory for stop_control_forward.1']
  %s0 = inlined_call_operand.vmem [shape: f32[1,40], index: 0, kind: input, shape index: {}]
  %s1 = inlined_call_operand.vmem [shape: f32[1,32], index: 1, kind: input, shape index: {}]
  %s2 = inlined_call_operand.hbm [shape: f32[40,128], index: 2, kind: input, shape index: {}]
  %s3 = inlined_call_operand.vmem [shape: f32[1,128], index: 3, kind: input, shape index: {}]
  %s4 = inlined_call_operand.vmem [shape: f32[1,32], index: 4, kind: input, shape index: {}]
  %s5 = inlined_call_operand.<no memory space> [shape: f32[1,1], index: 5, kind: input, shape index: {}]
  %s6 = inlined_call_operand.hbm [shape: f32[1,1], index: 6, kind: output, shape index: {0}]
  %s7 = inlined_call_operand.hbm [shape: f32[1,32], index: 7, kind: output, shape index: {1}]
  %s8 = inlined_call_operand.hbm [shape: f32[1,32], index: 8, kind: output, shape index: {2}]
  %9 = xla_tuple %s6, %s7, %s8
  %s10 = sld [smem:[#allocation0]]
  $region54: #{stop_control_forward.1} parent=0
    _
  %s12 = ssub.s32 1, %s10
  %s13 = scalar_select 0, %s12, %s10
  %v14 = vstv %s5
  %15 = vst [vmem:[#allocation2] sm:$0x1] %v14
  $region1: #{stop_control_forward.1} parent=0
    #allocation3 [shape = 'u8[20480]{0}', space=vmem, size = 0x5000, scoped, tag = 'input window, operand 2, single buffered']
    #allocation4 [shape = 's32[1]{0}', space=sflag, size = 0x4, scoped, tag = 'scoped memory for stop_control_forward.1']
    #allocation5 [shape = 's32[1]{0}', space=sflag, size = 0x4, scoped, tag = 'scoped memory for stop_control_forward.1']
    #allocation6 [shape = 'u8[512]{0}', space=vmem, size = 0x400, scoped, tag = 'output window, operand 0, single buffered']
    #allocation7 [shape = 'u8[512]{0}', space=vmem, size = 0x400, scoped, tag = 'output window, operand 1, single buffered']
    #allocation8 [shape = 's32[1]{0}', space=sflag, size = 0x4, scoped, tag = 'scoped memory for stop_control_forward.1']
    #allocation9 [shape = 'u8[512]{0}', space=vmem, size = 0x400, scoped, tag = 'output window, operand 2, single buffered']
    %16 = vsyncpa [#allocation4], 0
    %17 = vsyncpa [#allocation5], 0
    %18 = vsyncpa [#allocation8], 0
    // Predicated region
    $region2: #{stop_control_forward.1} parent=1 // pred_check
      _
    $region3: #{stop_control_forward.1} parent=1 // pred_check_branch
      %20 = sbr.rel (0) target = $region5
    $region4: #{stop_control_forward.1} parent=1 // pred_region
      _
    $region5: #{stop_control_forward.1} parent=1 // pred_fallthru
      _
    // Predicated region
    $region6: #{stop_control_forward.1} parent=1 // pred_check
      _
    $region7: #{stop_control_forward.1} parent=1 // pred_check_branch
      %22 = sbr.rel (0) target = $region9
    $region8: #{stop_control_forward.1} parent=1 // pred_region
      _
    $region9: #{stop_control_forward.1} parent=1 // pred_fallthru
      _
    // Predicated region
    $region10: #{stop_control_forward.1} parent=1 // pred_check
      _
    $region11: #{stop_control_forward.1} parent=1 // pred_check_branch
      %24 = sbr.rel (0) target = $region13
    $region12: #{stop_control_forward.1} parent=1 // pred_region
      %s26 = ssub.s32 640, 640
      %27 = vsyncadd [#allocation4], %s26
      %s28 = sshll.u32 [#allocation3], 4
      %s29 = int_to_ptr.vmem [resolvable:$true] %s28
      %34 = dma.hbm_to_vmem [thread:$0]  %s2, 640, %s29, [#allocation4], 128, 128, 8
    $region13: #{stop_control_forward.1} parent=1 // pred_fallthru
      _
    // Predicated region
    $region14: #{stop_control_forward.1} parent=1 // pred_check
      _
    $region15: #{stop_control_forward.1} parent=1 // pred_check_branch
      %36 = sbr.rel (0) target = $region17
    $region16: #{stop_control_forward.1} parent=1 // pred_region
      _
    $region17: #{stop_control_forward.1} parent=1 // pred_fallthru
      _
    // Predicated region
    $region18: #{stop_control_forward.1} parent=1 // pred_check
      _
    $region19: #{stop_control_forward.1} parent=1 // pred_check_branch
      %38 = sbr.rel (0) target = $region21
    $region20: #{stop_control_forward.1} parent=1 // pred_region
      _
    $region21: #{stop_control_forward.1} parent=1 // pred_fallthru
      _
    // Predicated region
    $region22: #{stop_control_forward.1} parent=1 // pred_check
      _
    $region23: #{stop_control_forward.1} parent=1 // pred_check_branch
      %40 = sbr.rel (0) target = $region25
    $region24: #{stop_control_forward.1} parent=1 // pred_region
      _
    $region25: #{stop_control_forward.1} parent=1 // pred_fallthru
      _
    // Predicated region
    $region26: #{stop_control_forward.1} parent=1 // pred_check
      _
    $region27: #{stop_control_forward.1} parent=1 // pred_check_branch
      %42 = sbr.rel (0) target = $region29
    $region28: #{stop_control_forward.1} parent=1 // pred_region
      %43 = dma.done [#allocation4], 640
    $region29: #{stop_control_forward.1} parent=1 // pred_fallthru
      _
    %v44 = vld [vmem:[%s0] sm:$0x1]
    %v45 = vld [vmem:[%s1] sm:$0x1]
    %v46 = vld [vmem:[#allocation3] sm:$0xff]
    %v47 = vld [vmem:[#allocation3 + $0x8] sm:$0xff]
    %v48 = vld [vmem:[#allocation3 + $0x10] sm:$0xff]
    %v49 = vld [vmem:[#allocation3 + $0x18] sm:$0xff]
    %v50 = vld [vmem:[#allocation3 + $0x20] sm:$0xff]
    %v51 = vld [vmem:[%s3] sm:$0x1]
    %vm52 = vcmask 326656
    %v54 = vsel %vm52, %v44, 0
    %56 = vmatprep.subr.mxu0 0.0
    %57 = vmatpush1.msra.mxu0 %v46
    %58 = vmatprep.subr.mxu0 0.0
    %59 = vmatpush1.msra.mxu0 %v47
    %60 = vmatprep.subr.mxu0 0.0
    %61 = vmatpush1.msra.mxu0 %v48
    %62 = vmatprep.subr.mxu0 0.0
    %63 = vmatpush1.msra.mxu0 %v49
    %64 = vmatprep.subr.mxu0 0.0
    %65 = vmatpush1.msra.mxu0 %v50
    %66 = vmatprep.subr.mxu0 0.0
    %67 = vmatpush1.msra.mxu0 0.0
    %68 = vmatprep.subr.mxu0 0.0
    %69 = vmatpush1.msra.mxu0 0.0
    %70 = vmatprep.subr.mxu0 0.0
    %71 = vmatpush1.msra.mxu0 0.0
    %72 = vmatprep.subr.mxu0 0.0
    %73 = vmatpush1.msra.mxu0 0.0
    %74 = vmatprep.subr.mxu0 0.0
    %75 = vmatpush1.msra.mxu0 0.0
    %76 = vmatprep.subr.mxu0 0.0
    %77 = vmatpush1.msra.mxu0 0.0
    %78 = vmatprep.subr.mxu0 0.0
    %79 = vmatpush1.msra.mxu0 0.0
    %80 = vmatprep.subr.mxu0 0.0
    %81 = vmatpush1.msra.mxu0 0.0
    %82 = vmatprep.subr.mxu0 0.0
    %83 = vmatpush1.msra.mxu0 0.0
    %84 = vmatprep.subr.mxu0 0.0
    %85 = vmatpush1.msra.mxu0 0.0
    %86 = vmatprep.subr.mxu0 0.0
    %87 = vmatpush1.msra.mxu0 0.0
    %88 = vmatprep.subr.mxu0 0.0
    %89 = vmatpush1.msra.mxu0 0.0
    %90 = vmatprep.subr.mxu0 0.0
    %91 = vmatpush1.msra.mxu0 0.0
    %92 = vmatprep.subr.mxu0 0.0
    %93 = vmatpush1.msra.mxu0 0.0
    %94 = vmatprep.subr.mxu0 0.0
    %95 = vmatpush1.msra.mxu0 0.0
    %96 = vmatprep.subr.mxu0 0.0
    %97 = vmatpush1.msra.mxu0 0.0
    %98 = vmatprep.subr.mxu0 0.0
    %99 = vmatpush1.msra.mxu0 0.0
    %100 = vmatprep.subr.mxu0 0.0
    %101 = vmatpush1.msra.mxu0 0.0
    %102 = vmatprep.subr.mxu0 0.0
    %103 = vmatpush1.msra.mxu0 0.0
    %104 = vmatprep.subr.mxu0 0.0
    %105 = vmatpush1.msra.mxu0 0.0
    %106 = vmatprep.subr.mxu0 0.0
    %107 = vmatpush1.msra.mxu0 0.0
    %108 = vmatprep.subr.mxu0 0.0
    %109 = vmatpush1.msra.mxu0 0.0
    %110 = vmatprep.subr.mxu0 0.0
    %111 = vmatpush1.msra.mxu0 0.0
    %112 = vmatprep.subr.mxu0 0.0
    %113 = vmatpush1.msra.mxu0 0.0
    %114 = vmatprep.subr.mxu0 0.0
    %115 = vmatpush1.msra.mxu0 0.0
    %116 = vmatprep.subr.mxu0 0.0
    %117 = vmatpush1.msra.mxu0 0.0
    %118 = vmatprep.subr.mxu0 0.0
    %119 = vmatpush1.msra.mxu0 0.0
    %120 = vmatprep.mubr.f32.mxu0 0.0
    %121 = vmatmul.mubr.f32.gmra.mrb[0].mxu0 %v54
    %v122 = vpop.f32.mrb[0].mxu0
    %v123 = vadd.f32 %v51, %v122
    %v124 = vpop.f32.mrb[0].mxu0
    %125 = vdwg.mxu0
    %v126 = vxor.u32 %v123, 2147483648
    %v127 = vmul.f32 %v126, 1.442695
    %v128 = vpow.pop %v127
    %v129 = vadd.f32 %v128, 1.0
    %v130 = vrcp.pop %v129
    %v131 = vmul.f32 1.0, %v130
    %v132 = vtanh.pop %v123
    %v134 = vlaneseq
    %v135 = vshrl.u32 %v134, 7
    %v136 = vsub.s32 0, %v135
    %v137 = vrot.slane %v45, %v136
    %138 = vrot.lane.b32.xlu0 %v137, 32
    %v139 = vpop.permute.xlu0 %138
    %v141 = vmul.f32 %v131, %v139
    %143 = vrot.lane.b32.xlu0 %v132, 64
    %v144 = vpop.permute.xlu0 %143
    %v146 = vmul.f32 %v131, %v144
    %148 = vrot.lane.b32.xlu0 %v146, 32
    %v149 = vpop.permute.xlu0 %148
    %v151 = vadd.f32 %v141, %v149
    %v152 = vtanh.pop %v151
    %154 = vrot.lane.b32.xlu0 %v152, 64
    %v155 = vpop.permute.xlu0 %154
    %v157 = vmul.f32 %v131, %v155
    %v158 = vld [vmem:[%s4] sm:$0x1]
    %v160 = vlaneseq
    %v161 = vshrl.u32 %v160, 7
    %v162 = vsub.s32 0, %v161
    %v163 = vrot.slane %v158, %v162
    %164 = vrot.lane.b32.xlu0 %v163, 96
    %v165 = vpop.permute.xlu0 %164
    %v167 = vmul.f32 %v157, %v165
    %169 = vrot.lane.b32.xlu0 %v167, 32
    %v170 = vpop.permute.xlu0 %169
    %vm172 = vcmask 253952
    %v173 = vsel %vm172, %v170, 0.0
    %174 = vadd.xlane.f32.xlu0 %v173
    %v175 = vpop.xlane.xlu0 %174
    %v176 = vld [vmem:[#allocation2] sm:$0x1]
    %v177 = vadd.f32 %v175, %v176
    %v178 = vxor.u32 %v177, 2147483648
    %v179 = vmul.f32 %v178, 1.442695
    %v180 = vpow.pop %v179
    %v181 = vadd.f32 %v180, 1.0
    %v182 = vrcp.pop %v181
    %v183 = vmul.f32 1.0, %v182
    %vm184 = vcmask 0
    %185 = vst.msk [vmem:[#allocation6] sm:$0x1] %vm184, %v183
    %187 = vrot.lane.b32.xlu0 %v157, 32
    %v188 = vpop.permute.xlu0 %187
    %190 = vst.msk [vmem:[#allocation7] sm:$0x1] %vm172, %v188
    %192 = vrot.lane.b32.xlu0 %v151, 96
    %v193 = vpop.permute.xlu0 %192
    %195 = vst.msk [vmem:[#allocation9] sm:$0x1] %vm172, %v193
    // Predicated region
    $region30: #{stop_control_forward.1} parent=1 // pred_check
      _
    $region31: #{stop_control_forward.1} parent=1 // pred_check_branch
      %197 = sbr.rel (0) target = $region33
    $region32: #{stop_control_forward.1} parent=1 // pred_region
      %s199 = ssub.s32 16, 16
      %200 = vsyncadd [#allocation5], %s199
      %s202 = sshll.u32 [#allocation6], 4
      %s203 = int_to_ptr.vmem [resolvable:$true] %s202
      %205 = dma.vmem_to_hbm [thread:$0]  %s203, 16, %s6, [#allocation5]
    $region33: #{stop_control_forward.1} parent=1 // pred_fallthru
      _
    // Predicated region
    $region34: #{stop_control_forward.1} parent=1 // pred_check
      _
    $region35: #{stop_control_forward.1} parent=1 // pred_check_branch
      %207 = sbr.rel (0) target = $region37
    $region36: #{stop_control_forward.1} parent=1 // pred_region
      %s209 = ssub.s32 16, 16
      %210 = vsyncadd [#allocation8], %s209
      %s212 = sshll.u32 [#allocation7], 4
      %s213 = int_to_ptr.vmem [resolvable:$true] %s212
      %215 = dma.vmem_to_hbm [thread:$0]  %s213, 16, %s7, [#allocation8]
    $region37: #{stop_control_forward.1} parent=1 // pred_fallthru
      _
    // Predicated region
    $region38: #{stop_control_forward.1} parent=1 // pred_check
      _
    $region39: #{stop_control_forward.1} parent=1 // pred_check_branch
      %217 = sbr.rel (0) target = $region41
    $region40: #{stop_control_forward.1} parent=1 // pred_region
      %s219 = ssub.s32 16, 16
      %220 = vsyncadd [#allocation8], %s219
      %s222 = sshll.u32 [#allocation9], 4
      %s223 = int_to_ptr.vmem [resolvable:$true] %s222
      %225 = dma.vmem_to_hbm [thread:$0]  %s223, 16, %s8, [#allocation8]
    $region41: #{stop_control_forward.1} parent=1 // pred_fallthru
      _
    // Predicated region
    $region42: #{stop_control_forward.1} parent=1 // pred_check
      _
    $region43: #{stop_control_forward.1} parent=1 // pred_check_branch
      %227 = sbr.rel (0) target = $region45
    $region44: #{stop_control_forward.1} parent=1 // pred_region
      %228 = dma.done [#allocation5], 16
    $region45: #{stop_control_forward.1} parent=1 // pred_fallthru
      _
    // Predicated region
    $region46: #{stop_control_forward.1} parent=1 // pred_check
      _
    $region47: #{stop_control_forward.1} parent=1 // pred_check_branch
      %230 = sbr.rel (0) target = $region49
    $region48: #{stop_control_forward.1} parent=1 // pred_region
      %231 = dma.done [#allocation8], 16
    $region49: #{stop_control_forward.1} parent=1 // pred_fallthru
      _
    // Predicated region
    $region50: #{stop_control_forward.1} parent=1 // pred_check
      _
    $region51: #{stop_control_forward.1} parent=1 // pred_check_branch
      %233 = sbr.rel (0) target = $region53
    $region52: #{stop_control_forward.1} parent=1 // pred_region
      %234 = dma.done [#allocation8], 16
    $region53: #{stop_control_forward.1} parent=1 // pred_fallthru
      _
    %235 = vsyncpa [#allocation4], 1
    %236 = vsyncpa [#allocation5], 1
    %237 = vsyncpa [#allocation8], 1

</llo_original>
